<compile_context>
chip_gen: v7x
topology: tpu7x:2x2x1
jax: 0.10.0
libtpu: 0.0.40
codegen_flags: <defaults>
</compile_context>

<pallas_src>
import functools

import jax
import jax.numpy as jnp
import numpy as np
from jax.experimental import pallas as pl
from jax.experimental.pallas import tpu as pltpu


def _localization_kernel(x_ref, m_ref, o_ref, *, w):
    """x_ref: (1, tc, hwp); m_ref: (4, hwp) border masks; o_ref: (1, 2, tc, hwp)."""
    x = x_ref[0].astype(jnp.float32)          # (tc, hwp), explicit f32 compute path
    tc, hwp = x.shape

    # 0/1 border masks, one hoisted broadcast each (JAX does not CSE
    # broadcast_in_dim, so do it once instead of once per multiply).
    m_i0 = jnp.broadcast_to(m_ref[0:1, :], (tc, hwp))   # row > 0
    m_ih = jnp.broadcast_to(m_ref[1:2, :], (tc, hwp))   # row < h-1
    m_j0 = jnp.broadcast_to(m_ref[2:3, :], (tc, hwp))   # col > 0
    m_jw = jnp.broadcast_to(m_ref[3:4, :], (tc, hwp))   # col < w-1

    def rolled(v, k):
        # out[p] = v[(p - k) mod hwp]   (jnp.roll semantics, XLU lane rotate)
        return pltpu.roll(v, shift=k, axis=1)

    # Neighbours of pixel p = i*w + j under zero padding.
    up    = rolled(x, w) * m_i0               # x[i-1, j]
    down  = rolled(x, hwp - w) * m_ih         # x[i+1, j]
    left  = rolled(x, 1) * m_j0               # x[i,   j-1]
    right = rolled(x, hwp - 1) * m_jw         # x[i,   j+1]

    dii = up + down - 2.0 * x
    djj = left + right - 2.0 * x
    ud = down - up                            # = 2 * di
    rl = right - left                         # = 2 * dj

    # dij = 0.25*(ul - ur - dl + dr).  Reuse rl: rolling (right - left) one row
    # down gives (dr - dl), one row up gives (ur - ul) -> only 2 extra rolls
    # instead of 4 and no extra tile-wide subtracts.
    dij = 0.25 * (rolled(rl, hwp - w) * m_ih - rolled(rl, w) * m_i0)

    det = dii * djj - dij * dij
    # EUP approximate reciprocal + one Newton-Raphson step; the 0.5 of di/dj is
    # folded in, so half_rdet == 0.5/det to ~2^-28 relative (EUP slot is idle,
    # keeps the divide off the VALU critical path).
    r = pl.reciprocal(det, approx=True)
    half_rdet = r * (1.0 - 0.5 * (det * r))

    # step_i = (dij*dj - djj*di)/det ; step_j = (dij*di - dii*dj)/det
    o_ref[0, 0] = ((dij * rl - djj * ud) * half_rdet).astype(o_ref.dtype)
    o_ref[0, 1] = ((dij * ud - dii * rl) * half_rdet).astype(o_ref.dtype)


def _vmem_capacity_bytes():
    try:
        return int(pltpu.get_tpu_info().vmem_capacity_bytes)
    except Exception:
        return 64 * 1024 * 1024     # v7x per-TC floor; safe default everywhere


def _pick_channel_tile(b, c, hwp, budget_bytes):
    """Channels per grid step, sized against the live VMEM footprint.

    Per channel row: 3 I/O planes (x in, step_i/step_j out) double-buffered by
    the BlockSpec pipeline, plus ~18 tile-sized f32 temporaries the kernel body
    materializes (neighbours, derivatives, det, reciprocal, hoisted masks).
    """
    bytes_per_row = (2 * 3 + 18) * hwp * 4
    cap = max(int(budget_bytes // bytes_per_row), 1)

    # Valid channel tiles: multiples of 8 dividing c (full vreg sublanes, exact
    # grid, (8,128)-aligned blocks), or the full channel dim.
    aligned = [t for t in range(8, c + 1, 8) if c % t == 0]
    fitting = [t for t in aligned if t <= cap]
    if fitting:
        tc = fitting[-1]
    elif aligned:
        tc = aligned[0]          # smallest aligned divisor; may slightly exceed budget
    else:
        tc = c                   # c has no multiple-of-8 divisor: full-dim block
    if c <= cap and tc > cap:
        tc = c                   # full-dim block is also legal and fits the budget

    # v7x has 2 TensorCores sharing the 'parallel' grid axes: keep >= 2 steps
    # when the channel axis can still be split with aligned tiles.
    if b * (c // tc) < 2:
        smaller = [t for t in aligned if t < tc]
        if smaller:
            tc = smaller[-1]
    return tc


def handcrafted_localization(x):
    """x: (b, c, h, w) -> (b, 2, c, h, w)  ==  torch.stack([step_i, step_j], 1)."""
    b, c, h, w = x.shape
    hw = h * w
    hwp = ((hw + 127) // 128) * 128           # lane-dense last dim

    x3 = x.reshape(b, c, hw)                  # metadata-only merge of minor dims
    if hwp != hw:
        x3 = jnp.pad(x3, ((0, 0), (0, 0), (0, hwp - hw)))

    # Constant 0/1 border masks over the (padded) flattened h*w axis, built
    # host-side so no in-kernel iota / integer div is needed. Pad lanes -> 0.
    idx = np.arange(hwp)
    row, col = idx // w, idx % w
    valid = idx < hw
    masks = jnp.asarray(np.stack([
        (row > 0) & valid,
        (row < h - 1) & valid,
        (col > 0) & valid,
        (col < w - 1) & valid,
    ]).astype(np.float32))

    vmem_cap = _vmem_capacity_bytes()
    vmem_limit = min(vmem_cap * 3 // 4, 96 * 1024 * 1024)
    tc = _pick_channel_tile(b, c, hwp, budget_bytes=vmem_limit * 2 // 3)

    kernel = functools.partial(_localization_kernel, w=w)

    # Note: on v5e (HBM-bound) an extra input buffer (pl.Buffered(3)) could hide
    # more DMA latency; left at the default double-buffering for portability.
    out = pl.pallas_call(
        kernel,
        out_shape=jax.ShapeDtypeStruct((b, 2, c, hwp), x.dtype),
        grid_spec=pltpu.PrefetchScalarGridSpec(
            num_scalar_prefetch=0,
            grid=(b, c // tc),
            in_specs=[
                pl.BlockSpec((1, tc, hwp), lambda bi, ci: (bi, ci, 0)),
                pl.BlockSpec((4, hwp), lambda bi, ci: (0, 0)),
            ],
            out_specs=pl.BlockSpec((1, 2, tc, hwp), lambda bi, ci: (bi, 0, ci, 0)),
        ),
        compiler_params=pltpu.CompilerParams(
            dimension_semantics=("parallel", "parallel"),
            vmem_limit_bytes=vmem_limit,
        ),
    )(x3, masks)

    if hwp != hw:
        out = out[..., :hw]
    return out.reshape(b, 2, c, h, w)         # metadata-only split of minor dim


def _reference(x):
    """Pure-JAX mirror of the torch module (zero-padded 3x3 convs)."""
    b, c, h, w = x.shape
    xp = jnp.pad(x, ((0, 0), (0, 0), (1, 1), (1, 1)))
    center = xp[:, :, 1:h + 1, 1:w + 1]
    up     = xp[:, :, 0:h,     1:w + 1]
    down   = xp[:, :, 2:h + 2, 1:w + 1]
    left   = xp[:, :, 1:h + 1, 0:w]
    right  = xp[:, :, 1:h + 1, 2:w + 2]
    ul = xp[:, :, 0:h, 0:w];     ur = xp[:, :, 0:h, 2:w + 2]
    dl = xp[:, :, 2:h + 2, 0:w]; dr = xp[:, :, 2:h + 2, 2:w + 2]
    dii = up - 2.0 * center + down
    djj = left - 2.0 * center + right
    dij = 0.25 * (ul - ur - dl + dr)
    di = 0.5 * (down - up)
    dj = 0.5 * (right - left)
    det = dii * djj - dij * dij
    step_i = -(djj * di - dij * dj) / det
    step_j = -(dii * dj - dij * di) / det
    steps = jnp.stack([step_i, step_j], axis=1)
    # Compare only well-conditioned points: where det nearly cancels, fp noise
    # is amplified arbitrarily (the torch module emits inf/garbage there too).
    good = jnp.abs(det) > 1e-2 * (jnp.abs(dii * djj) + dij * dij + 1e-30)
    return steps, good[:, None, :, :, :]


if __name__ == "__main__":
    key = jax.random.PRNGKey(0)
    b, c, h, w = 2, 4, 16, 16
    x = jax.random.normal(key, (b, c, h, w), dtype=jnp.float32)

    out = jax.block_until_ready(handcrafted_localization(x))
    ref, good = _reference(x)

    assert out.shape == (b, 2, c, h, w), out.shape
    assert out.dtype == x.dtype, out.dtype
    mask = good & jnp.isfinite(ref) & jnp.isfinite(out)
    err = jnp.where(mask, jnp.abs(out - ref), 0.0)
    tol = 1e-4 + 1e-3 * jnp.where(mask, jnp.abs(ref), 0.0)
    assert bool(jnp.all(err <= tol)), float(jnp.max(err - tol))
    assert float(jnp.mean(mask.astype(jnp.float32))) > 0.5  # most points compared
    print("KERNEL_OK")
</pallas_src>

<mosaic_0001>
module attributes {stable_mosaic.version = 11 : i64} {
  func.func @_localization_kernel(%arg0: i32, %arg1: i32, %arg2: memref<1x4x256xf32, #tpu.memory_space<vmem>>, %arg3: memref<4x256xf32, #tpu.memory_space<vmem>>, %arg4: memref<1x2x4x256xf32, #tpu.memory_space<vmem>>) attributes {dimension_semantics = [#tpu.dimension_semantics<parallel>, #tpu.dimension_semantics<parallel>], iteration_bounds = array<i64: 2, 1>, scalar_prefetch = 0 : i64, scratch_operands = 0 : i64, tpu.core_type = #tpu.core_type<tc>, window_params = [{transform_indices = @transform_0, window_bounds = array<i64: 1, 4, 256>}, {pipeline_mode = #tpu.pipeline_mode<synchronous>, transform_indices = @transform_1, window_bounds = array<i64: 4, 256>}, {transform_indices = @transform_2, window_bounds = array<i64: 1, 2, 4, 256>}]} {
    %c0 = arith.constant 0 : index
    %c0_0 = arith.constant 0 : index
    %c0_1 = arith.constant 0 : index
    %0 = vector.load %arg2[%c0, %c0_0, %c0_1] : memref<1x4x256xf32, #tpu.memory_space<vmem>>, vector<1x4x256xf32>
    %1 = vector.shape_cast %0 : vector<1x4x256xf32> to vector<4x256xf32>
    %c0_2 = arith.constant 0 : index
    %c0_3 = arith.constant 0 : index
    %2 = vector.load %arg3[%c0_2, %c0_3] : memref<4x256xf32, #tpu.memory_space<vmem>>, vector<1x256xf32>
    %3 = vector.shape_cast %2 : vector<1x256xf32> to vector<1x256xf32>
    %4 = vector.broadcast %3 : vector<1x256xf32> to vector<4x256xf32>
    %c1 = arith.constant 1 : index
    %c0_4 = arith.constant 0 : index
    %5 = vector.load %arg3[%c1, %c0_4] : memref<4x256xf32, #tpu.memory_space<vmem>>, vector<1x256xf32>
    %6 = vector.shape_cast %5 : vector<1x256xf32> to vector<1x256xf32>
    %7 = vector.broadcast %6 : vector<1x256xf32> to vector<4x256xf32>
    %c2 = arith.constant 2 : index
    %c0_5 = arith.constant 0 : index
    %8 = vector.load %arg3[%c2, %c0_5] : memref<4x256xf32, #tpu.memory_space<vmem>>, vector<1x256xf32>
    %9 = vector.shape_cast %8 : vector<1x256xf32> to vector<1x256xf32>
    %10 = vector.broadcast %9 : vector<1x256xf32> to vector<4x256xf32>
    %c3 = arith.constant 3 : index
    %c0_6 = arith.constant 0 : index
    %11 = vector.load %arg3[%c3, %c0_6] : memref<4x256xf32, #tpu.memory_space<vmem>>, vector<1x256xf32>
    %12 = vector.shape_cast %11 : vector<1x256xf32> to vector<1x256xf32>
    %13 = vector.broadcast %12 : vector<1x256xf32> to vector<4x256xf32>
    %c16_i32 = arith.constant 16 : i32
    %14 = tpu.dynamic_rotate %1 by %c16_i32 dim 1 : vector<4x256xf32>, i32 -> vector<4x256xf32>
    %15 = arith.mulf %14, %4 : vector<4x256xf32>
    %c240_i32 = arith.constant 240 : i32
    %16 = tpu.dynamic_rotate %1 by %c240_i32 dim 1 : vector<4x256xf32>, i32 -> vector<4x256xf32>
    %17 = arith.mulf %16, %7 : vector<4x256xf32>
    %c1_i32 = arith.constant 1 : i32
    %18 = tpu.dynamic_rotate %1 by %c1_i32 dim 1 : vector<4x256xf32>, i32 -> vector<4x256xf32>
    %19 = arith.mulf %18, %10 : vector<4x256xf32>
    %c255_i32 = arith.constant 255 : i32
    %20 = tpu.dynamic_rotate %1 by %c255_i32 dim 1 : vector<4x256xf32>, i32 -> vector<4x256xf32>
    %21 = arith.mulf %20, %13 : vector<4x256xf32>
    %22 = arith.addf %15, %17 : vector<4x256xf32>
    %cst = arith.constant 2.000000e+00 : f32
    %23 = vector.broadcast %cst : f32 to vector<4x256xf32>
    %24 = arith.mulf %23, %1 : vector<4x256xf32>
    %25 = arith.subf %22, %24 : vector<4x256xf32>
    %26 = arith.addf %19, %21 : vector<4x256xf32>
    %cst_7 = arith.constant 2.000000e+00 : f32
    %27 = vector.broadcast %cst_7 : f32 to vector<4x256xf32>
    %28 = arith.mulf %27, %1 : vector<4x256xf32>
    %29 = arith.subf %26, %28 : vector<4x256xf32>
    %30 = arith.subf %17, %15 : vector<4x256xf32>
    %31 = arith.subf %21, %19 : vector<4x256xf32>
    %c240_i32_8 = arith.constant 240 : i32
    %32 = tpu.dynamic_rotate %31 by %c240_i32_8 dim 1 : vector<4x256xf32>, i32 -> vector<4x256xf32>
    %33 = arith.mulf %32, %7 : vector<4x256xf32>
    %c16_i32_9 = arith.constant 16 : i32
    %34 = tpu.dynamic_rotate %31 by %c16_i32_9 dim 1 : vector<4x256xf32>, i32 -> vector<4x256xf32>
    %35 = arith.mulf %34, %4 : vector<4x256xf32>
    %36 = arith.subf %33, %35 : vector<4x256xf32>
    %cst_10 = arith.constant 2.500000e-01 : f32
    %37 = vector.broadcast %cst_10 : f32 to vector<4x256xf32>
    %38 = arith.mulf %37, %36 : vector<4x256xf32>
    %39 = arith.mulf %25, %29 : vector<4x256xf32>
    %40 = arith.mulf %38, %38 : vector<4x256xf32>
    %41 = arith.subf %39, %40 : vector<4x256xf32>
    %42 = tpu.reciprocal %41 {approx = true} : vector<4x256xf32> -> vector<4x256xf32>
    %43 = arith.mulf %41, %42 : vector<4x256xf32>
    %cst_11 = arith.constant 5.000000e-01 : f32
    %44 = vector.broadcast %cst_11 : f32 to vector<4x256xf32>
    %45 = arith.mulf %44, %43 : vector<4x256xf32>
    %cst_12 = arith.constant 1.000000e+00 : f32
    %46 = vector.broadcast %cst_12 : f32 to vector<4x256xf32>
    %47 = arith.subf %46, %45 : vector<4x256xf32>
    %48 = arith.mulf %42, %47 : vector<4x256xf32>
    %49 = arith.mulf %38, %31 : vector<4x256xf32>
    %50 = arith.mulf %29, %30 : vector<4x256xf32>
    %51 = arith.subf %49, %50 : vector<4x256xf32>
    %52 = arith.mulf %51, %48 : vector<4x256xf32>
    %c0_13 = arith.constant 0 : index
    %c0_14 = arith.constant 0 : index
    %c0_15 = arith.constant 0 : index
    %c0_16 = arith.constant 0 : index
    %53 = vector.load %arg4[%c0_13, %c0_14, %c0_15, %c0_16] : memref<1x2x4x256xf32, #tpu.memory_space<vmem>>, vector<1x1x4x256xf32>
    %54 = vector.shape_cast %53 : vector<1x1x4x256xf32> to vector<4x256xf32>
    %55 = vector.shape_cast %52 : vector<4x256xf32> to vector<1x1x4x256xf32>
    tpu.vector_store %arg4[%c0_13, %c0_14, %c0_15, %c0_16], %55 {strides = array<i32>} : memref<1x2x4x256xf32, #tpu.memory_space<vmem>>, vector<1x1x4x256xf32>,
    %56 = arith.mulf %38, %30 : vector<4x256xf32>
    %57 = arith.mulf %25, %31 : vector<4x256xf32>
    %58 = arith.subf %56, %57 : vector<4x256xf32>
    %59 = arith.mulf %58, %48 : vector<4x256xf32>
    %c0_17 = arith.constant 0 : index
    %c1_18 = arith.constant 1 : index
    %c0_19 = arith.constant 0 : index
    %c0_20 = arith.constant 0 : index
    %60 = vector.load %arg4[%c0_17, %c1_18, %c0_19, %c0_20] : memref<1x2x4x256xf32, #tpu.memory_space<vmem>>, vector<1x1x4x256xf32>
    %61 = vector.shape_cast %60 : vector<1x1x4x256xf32> to vector<4x256xf32>
    %62 = vector.shape_cast %59 : vector<4x256xf32> to vector<1x1x4x256xf32>
    tpu.vector_store %arg4[%c0_17, %c1_18, %c0_19, %c0_20], %62 {strides = array<i32>} : memref<1x2x4x256xf32, #tpu.memory_space<vmem>>, vector<1x1x4x256xf32>,
    return
  }
  func.func @transform_0(%arg0: i32, %arg1: i32) -> (i32, i32, i32) {
    %c0_i32 = arith.constant 0 : i32
    %c0_i32_0 = arith.constant 0 : i32
    return %arg0, %arg1, %c0_i32 : i32, i32, i32
  }
  func.func @transform_1(%arg0: i32, %arg1: i32) -> (i32, i32) {
    %c0_i32 = arith.constant 0 : i32
    %c0_i32_0 = arith.constant 0 : i32
    %c0_i32_1 = arith.constant 0 : i32
    return %c0_i32, %c0_i32_0 : i32, i32
  }
  func.func @transform_2(%arg0: i32, %arg1: i32) -> (i32, i32, i32, i32) {
    %c0_i32 = arith.constant 0 : i32
    %c0_i32_0 = arith.constant 0 : i32
    %c0_i32_1 = arith.constant 0 : i32
    return %arg0, %c0_i32, %arg1, %c0_i32_0 : i32, i32, i32, i32
  }
}

</mosaic_0001>

<llo_original>
// kernel: tpu_custom_call.1
$region0: #{tpu_custom_call.1}
  #allocation0 [shape = 'u32[]', space=smem, size = 0x4, offset = 0x4, fixed_abs, tag = 'smem constant byte address 0x4 - core index']
  #allocation1 [shape = 'u32[144,128]{1,0:T(1,128)}', space=vmem, size = 0x12000, scoped, tag = 'internal scratch']
  %s0 = inlined_call_operand.hbm [shape: f32[2,4,256], index: 0, kind: input, shape index: {}]
  %s1 = inlined_call_operand.hbm [shape: f32[4,256], index: 1, kind: input, shape index: {}]
  %s2 = inlined_call_operand.hbm [shape: f32[2,2,4,256], index: 2, kind: output, shape index: {}]
  %s3 = sld [smem:[#allocation0]]
  $region49: #{tpu_custom_call.1} parent=0
    _
  %s5 = ssub.s32 1, %s3
  %s6 = scalar_select 0, %s5, %s3
  $region1: #{tpu_custom_call.1} parent=0
    #allocation2 [shape = 'u8[8192]{0}', space=vmem, size = 0x2000, scoped, tag = 'input window, operand 0']
    #allocation3 [shape = 's32[2]{0}', space=sflag, size = 0x8, scoped, tag = 'scoped memory for tpu_custom_call.1']
    #allocation4 [shape = 's32[2]{0}', space=sflag, size = 0x8, scoped, tag = 'scoped memory for tpu_custom_call.1']
    #allocation5 [shape = 'u8[4096]{0}', space=vmem, size = 0x1000, scoped, tag = 'input window, operand 1, single buffered']
    #allocation6 [shape = 's32[1]{0}', space=sflag, size = 0x4, scoped, tag = 'scoped memory for tpu_custom_call.1']
    #allocation7 [shape = 'u8[16384]{0}', space=vmem, size = 0x4000, scoped, tag = 'output window, operand 0']
    %7 = vsyncpa [#allocation3], 0
    %s8 = scalar_lea.sflag [#allocation3], 1
    %9 = vsyncpa %s8, 0
    %10 = vsyncpa [#allocation6], 0
    %11 = vsyncpa [#allocation4], 0
    %s12 = scalar_lea.sflag [#allocation4], 1
    %13 = vsyncpa %s12, 0
    loop: start=0, step=1, limit=4
    $region2: #{tpu_custom_call.1} parent=1 // loop_pre_header
      _
    $region3: #{tpu_custom_call.1} parent=1 // loop_header
      %s15 = sphi 0, %s19
      %p16 = scmp.ge.s32.totalorder %s15, 4
      %s22 = sphi 0, %s34
      %s23 = sphi 0, %s30
      %s24 = sphi 0, %s22
      %s25 = sphi 0, %s23
      %s26 = sphi 0, %s24
      %s27 = sphi 0, %s25
      %s39 = sphi 0, %s41
      %s42 = sphi 0, %s39
      %s43 = sphi 0, %s42
      %s59 = sphi 0, %s43
      %s63 = sphi 0, %s63
      %s65 = sphi 0, %s63
      %s66 = sphi 0, %s65
      %s80 = sphi 0, %s66
      %s88 = sphi 0, %s90
      %s91 = sphi 0, %s88
      %s92 = sphi 0, %s91
      %s108 = sphi 0, %s92
    $region4: #{tpu_custom_call.1} parent=1 // loop_header_branch
      %18 = sbr.rel (%p16) target = $region8
    $region5: #{tpu_custom_call.1} parent=1 // loop_body
      %s20 = ssub.s32 %s15, 1
      %s21 = ssub.s32 %s15, 2
      %s28 = sadd.s32 1, %s23
      %p29 = scmp.ge.s32.totalorder %s28, 1
      %s30 = scalar_select %p29, 0, %s28
      %s31 = sadd.s32 1, %s22
      %s32 = scalar_select %p29, %s31, %s22
      %p33 = scmp.ge.s32.totalorder %s32, 2
      %s34 = scalar_select %p33, 0, %s32
      %s35 = ssub.s32 %s22, %s34
      %s36 = ssub.s32 %s23, %s30
      %s37 = sor.u32 %s35, %s36
      %p38 = scmp.eq.s32.totalorder %s37, 0
      %s40 = sadd.s32 %s39, 1
      %s41 = scalar_select %p38, %s39, %s40
      %p44 = pneg %p38
      %p45 = scmp.eq.s32.totalorder %s15, 1
      %p46 = por %p44, %p45
      %p47 = scmp.ne.s32.totalorder %s39, %s42
      %p48 = scmp.eq.s32.totalorder %s15, 0
      %p49 = por %p47, %p48
      %p50 = scmp.ne.s32.totalorder %s39, %s42
      %p51 = scmp.eq.s32.totalorder %s20, 1
      %p52 = por %p50, %p51
      %p53 = scmp.ne.s32.totalorder %s42, %s43
      %p54 = scmp.eq.s32.totalorder %s20, 0
      %p55 = por %p53, %p54
      %p56 = scmp.ne.s32.totalorder %s42, %s43
      %p57 = scmp.eq.s32.totalorder %s21, 1
      %p58 = por %p56, %p57
      %p60 = scmp.ne.s32.totalorder %s43, %s59
      %p61 = scmp.eq.s32.totalorder %s21, 0
      %p62 = por %p60, %p61
      %s64 = sadd.s32 %s63, 1
      %p67 = scmp.eq.s32.totalorder %s15, 1
      %p68 = scmp.ne.s32.totalorder %s63, %s65
      %p69 = scmp.eq.s32.totalorder %s15, 0
      %p70 = por %p68, %p69
      %p71 = scmp.ne.s32.totalorder %s63, %s65
      %p72 = scmp.eq.s32.totalorder %s20, 1
      %p73 = por %p71, %p72
      %p74 = scmp.ne.s32.totalorder %s65, %s66
      %p75 = scmp.eq.s32.totalorder %s20, 0
      %p76 = por %p74, %p75
      %p77 = scmp.ne.s32.totalorder %s65, %s66
      %p78 = scmp.eq.s32.totalorder %s21, 1
      %p79 = por %p77, %p78
      %p81 = scmp.ne.s32.totalorder %s66, %s80
      %p82 = scmp.eq.s32.totalorder %s21, 0
      %p83 = por %p81, %p82
      %s84 = ssub.s32 %s22, %s34
      %s85 = ssub.s32 %s23, %s30
      %s86 = sor.u32 %s84, %s85
      %p87 = scmp.eq.s32.totalorder %s86, 0
      %s89 = sadd.s32 %s88, 1
      %s90 = scalar_select %p87, %s88, %s89
      %p93 = pneg %p87
      %p94 = scmp.eq.s32.totalorder %s15, 1
      %p95 = por %p93, %p94
      %p96 = scmp.ne.s32.totalorder %s88, %s91
      %p97 = scmp.eq.s32.totalorder %s15, 0
      %p98 = por %p96, %p97
      %p99 = scmp.ne.s32.totalorder %s88, %s91
      %p100 = scmp.eq.s32.totalorder %s20, 1
      %p101 = por %p99, %p100
      %p102 = scmp.ne.s32.totalorder %s91, %s92
      %p103 = scmp.eq.s32.totalorder %s20, 0
      %p104 = por %p102, %p103
      %p105 = scmp.ne.s32.totalorder %s91, %s92
      %p106 = scmp.eq.s32.totalorder %s21, 1
      %p107 = por %p105, %p106
      %p109 = scmp.ne.s32.totalorder %s92, %s108
      %p110 = scmp.eq.s32.totalorder %s21, 0
      %p111 = por %p109, %p110
      %p112 = scmp.le.s32.totalorder 1, %s15
      %p113 = scmp.lt.s32.totalorder %s15, 3
      %p114 = pnand %p112, %p113
      %p115 = pneg %p114
      // Predicated region
      $region9: #{tpu_custom_call.1} parent=5 // pred_check
        _
      $region10: #{tpu_custom_call.1} parent=5 // pred_check_branch
        %117 = sbr.rel (%p114) target = $region12
      $region11: #{tpu_custom_call.1} parent=5 // pred_region
        %s118 = ssub.s32 %s15, 1
        // Predicated region
        $region13: #{tpu_custom_call.1} parent=11 // pred_check
          %p119 = pneg %p76
        $region14: #{tpu_custom_call.1} parent=11 // pred_check_branch
          %121 = sbr.rel (%p119) target = $region16
        $region15: #{tpu_custom_call.1} parent=11 // pred_region
          %s123 = ssub.s32 128, 128
          %124 = vsyncadd [#allocation6], %s123
          %s126 = sshll.u32 [#allocation5], 4
          %s127 = int_to_ptr.vmem [resolvable:$true] %s126
          %129 = dma.hbm_to_vmem [thread:$0]  %s1, 128, %s127, [#allocation6]
        $region16: #{tpu_custom_call.1} parent=11 // pred_fallthru
          _
      $region12: #{tpu_custom_call.1} parent=5 // pred_fallthru
        _
      %p130 = scmp.lt.s32.totalorder %s15, 2
      // Predicated region
      $region17: #{tpu_custom_call.1} parent=5 // pred_check
        %p131 = pneg %p130
      $region18: #{tpu_custom_call.1} parent=5 // pred_check_branch
        %133 = sbr.rel (%p131) target = $region20
      $region19: #{tpu_custom_call.1} parent=5 // pred_region
        // Predicated region
        $region21: #{tpu_custom_call.1} parent=19 // pred_check
          %p134 = pneg %p49
        $region22: #{tpu_custom_call.1} parent=19 // pred_check_branch
          %136 = sbr.rel (%p134) target = $region24
        $region23: #{tpu_custom_call.1} parent=19 // pred_region
          %s137 = sand.u32 %s39, 1
          %s138 = scalar_lea.sflag [#allocation3], %s137
          %s139 = sand.u32 %s39, 1
          %s140 = smul.addr %s139, 8
          %s141 = scalar_lea.vmem [#allocation2], %s140
          %s143 = ssub.s32 128, 128
          %144 = vsyncadd %s138, %s143
          %s145 = smul.addr %s23, 2
          %s146 = smul.addr %s22, 2
          %s147 = sadd.s32 %s145, %s146
          %s148 = smul.addr %s147, 64
          %s149 = scalar_lea.hbm %s0, %s148
          %s151 = sshll.u32 %s141, 4
          %s152 = int_to_ptr.vmem [resolvable:$true] %s151
          %154 = dma.hbm_to_vmem [thread:$0]  %s149, 128, %s152, %s138
        $region24: #{tpu_custom_call.1} parent=19 // pred_fallthru
          _
      $region20: #{tpu_custom_call.1} parent=5 // pred_fallthru
        _
      %p155 = scmp.le.s32.totalorder 1, %s15
      %p156 = scmp.lt.s32.totalorder %s15, 3
      %p157 = pnand %p155, %p156
      %p158 = pneg %p157
      // Predicated region
      $region25: #{tpu_custom_call.1} parent=5 // pred_check
        _
      $region26: #{tpu_custom_call.1} parent=5 // pred_check_branch
        %160 = sbr.rel (%p157) target = $region28
      $region27: #{tpu_custom_call.1} parent=5 // pred_region
        %s161 = ssub.s32 %s15, 1
        %s162 = sand.u32 %s42, 1
        %s163 = scalar_lea.sflag [#allocation3], %s162
        %s164 = sand.u32 %s42, 1
        %s165 = smul.addr %s164, 8
        %s166 = scalar_lea.vmem [#allocation2], %s165
        // Predicated region
        $region29: #{tpu_custom_call.1} parent=27 // pred_check
          %p167 = pneg %p55
        $region30: #{tpu_custom_call.1} parent=27 // pred_check_branch
          %169 = sbr.rel (%p167) target = $region32
        $region31: #{tpu_custom_call.1} parent=27 // pred_region
          %170 = dma.done %s163, 128
        $region32: #{tpu_custom_call.1} parent=27 // pred_fallthru
          _
        // Predicated region
        $region33: #{tpu_custom_call.1} parent=27 // pred_check
          %p171 = pneg %p76
        $region34: #{tpu_custom_call.1} parent=27 // pred_check_branch
          %173 = sbr.rel (%p171) target = $region36
        $region35: #{tpu_custom_call.1} parent=27 // pred_region
          %174 = dma.done [#allocation6], 128
        $region36: #{tpu_custom_call.1} parent=27 // pred_fallthru
          _
        %s175 = sand.u32 %s42, 1
        %s176 = scalar_lea.sflag [#allocation3], %s175
        %s177 = sand.u32 %s42, 1
        %s178 = smul.addr %s177, 8
        %s179 = scalar_lea.vmem [#allocation2], %s178
        %p180 = pneg %p55
        %p181 = pneg %p52
        %p182 = pneg %p76
        %p183 = pneg %p73
        %p184 = pneg %p104
        %p185 = pneg %p101
        %s186 = sand.u32 %s91, 1
        %s187 = scalar_lea.sflag [#allocation4], %s186
        %s188 = sand.u32 %s91, 1
        %s189 = smul.addr %s188, 16
        %s190 = scalar_lea.vmem [#allocation7], %s189
        %v191 = vld [vmem:[%s166] sm:$0xff]
        %v192 = vld [vmem:[#allocation5] ss:$4 sm:$0x3]
        %v194 = vlaneseq
        %v195 = vshrl.u32 %v194, 7
        %v196 = vsub.s32 0, %v195
        %v197 = vrot.slane %v192, %v196
        %v198 = vlaneseq
        %v199 = vshrl.u32 %v198, 7
        %v200 = vsub.s32 1, %v199
        %v201 = vrot.slane %v192, %v200
        %s204 = scalar_lea.vmem [#allocation5], 1
        %v205 = vld [vmem:[%s204] ss:$4 sm:$0x3]
        %v207 = vlaneseq
        %v208 = vshrl.u32 %v207, 7
        %v209 = vsub.s32 0, %v208
        %v210 = vrot.slane %v205, %v209
        %v211 = vlaneseq
        %v212 = vshrl.u32 %v211, 7
        %v213 = vsub.s32 1, %v212
        %v214 = vrot.slane %v205, %v213
        %s217 = scalar_lea.vmem [#allocation5], 2
        %v218 = vld [vmem:[%s217] ss:$4 sm:$0x3]
        %v220 = vlaneseq
        %v221 = vshrl.u32 %v220, 7
        %v222 = vsub.s32 0, %v221
        %v223 = vrot.slane %v218, %v222
        %v224 = vlaneseq
        %v225 = vshrl.u32 %v224, 7
        %v226 = vsub.s32 1, %v225
        %v227 = vrot.slane %v218, %v226
        %s230 = scalar_lea.vmem [#allocation5], 3
        %v231 = vld [vmem:[%s230] ss:$4 sm:$0x3]
        %v233 = vlaneseq
        %v234 = vshrl.u32 %v233, 7
        %v235 = vsub.s32 0, %v234
        %v236 = vrot.slane %v231, %v235
        %v237 = vlaneseq
        %v238 = vshrl.u32 %v237, 7
        %v239 = vsub.s32 1, %v238
        %v240 = vrot.slane %v231, %v239
        %v244 = vcombine.high %v191, %v191
        %246 = vrot.lane.b32.xlu0 %v191, 16
        %v247 = vpop.permute.xlu0 %246
        %248 = vrot.lane.b32.xlu0 %v244, 16
        %v249 = vpop.permute.xlu0 %248
        %v250 = vlaneseq
        %v251 = vand.u32 %v250, 127
        %vm252 = vcmp.lt.s32.totalorder %v251, 16
        %v253 = vsel %vm252, %v247, %v249
        %v254 = vsel %vm252, %v249, %v247
        %v255 = vmul.f32 %v254, %v197
        %v256 = vmul.f32 %v253, %v201
        %257 = vrot.lane.b32.xlu0 %v191, 112
        %v258 = vpop.permute.xlu0 %257
        %259 = vrot.lane.b32.xlu0 %v244, 112
        %v260 = vpop.permute.xlu0 %259
        %vm261 = vcmp.lt.s32.totalorder %v251, 112
        %v262 = vsel %vm261, %v258, %v260
        %v263 = vsel %vm261, %v260, %v258
        %v264 = vmul.f32 %v262, %v210
        %v265 = vmul.f32 %v263, %v214
        %266 = vrot.lane.b32.xlu0 %v191, 1
        %v267 = vpop.permute.xlu0 %266
        %268 = vrot.lane.b32.xlu0 %v244, 1
        %v269 = vpop.permute.xlu0 %268
        %vm270 = vcmp.lt.s32.totalorder %v251, 1
        %v271 = vsel %vm270, %v267, %v269
        %v272 = vsel %vm270, %v269, %v267
        %v273 = vmul.f32 %v272, %v223
        %v274 = vmul.f32 %v271, %v227
        %275 = vrot.lane.b32.xlu0 %v191, 127
        %v276 = vpop.permute.xlu0 %275
        %277 = vrot.lane.b32.xlu0 %v244, 127
        %v278 = vpop.permute.xlu0 %277
        %vm279 = vcmp.lt.s32.totalorder %v251, 127
        %v280 = vsel %vm279, %v276, %v278
        %v281 = vsel %vm279, %v278, %v276
        %v282 = vmul.f32 %v280, %v236
        %v283 = vmul.f32 %v281, %v240
        %v284 = vadd.f32 %v255, %v264
        %v285 = vadd.f32 %v256, %v265
        %v286 = vmul.f32 %v191, 2.0
        %v288 = vcombine.high %v286, %v286
        %v290 = vsub.f32 %v284, %v286
        %v291 = vsub.f32 %v285, %v288
        %v292 = vadd.f32 %v273, %v282
        %v293 = vadd.f32 %v274, %v283
        %v294 = vsub.f32 %v292, %v286
        %v295 = vsub.f32 %v293, %v288
        %v296 = vsub.f32 %v264, %v255
        %v297 = vsub.f32 %v265, %v256
        %v298 = vsub.f32 %v282, %v273
        %v299 = vsub.f32 %v283, %v274
        %300 = vrot.lane.b32.xlu0 %v298, 112
        %v301 = vpop.permute.xlu0 %300
        %302 = vrot.lane.b32.xlu0 %v299, 112
        %v303 = vpop.permute.xlu0 %302
        %v304 = vsel %vm261, %v301, %v303
        %v305 = vsel %vm261, %v303, %v301
        %v306 = vmul.f32 %v304, %v210
        %v307 = vmul.f32 %v305, %v214
        %308 = vrot.lane.b32.xlu0 %v298, 16
        %v309 = vpop.permute.xlu0 %308
        %310 = vrot.lane.b32.xlu0 %v299, 16
        %v311 = vpop.permute.xlu0 %310
        %v312 = vsel %vm252, %v309, %v311
        %v313 = vsel %vm252, %v311, %v309
        %v314 = vmul.f32 %v313, %v197
        %v315 = vmul.f32 %v312, %v201
        %v316 = vsub.f32 %v306, %v314
        %v317 = vsub.f32 %v307, %v315
        %v318 = vmul.f32 %v316, 0.25
        %v319 = vmul.f32 %v317, 0.25
        %v320 = vmul.f32 %v290, %v294
        %v321 = vmul.f32 %v291, %v295
        %v322 = vmul.f32 %v318, %v318
        %v323 = vmul.f32 %v319, %v319
        %v324 = vsub.f32 %v320, %v322
        %v325 = vsub.f32 %v321, %v323
        %v326 = vrcp.pop %v324
        %v327 = vrcp.pop %v325
        %v328 = vmul.f32 %v324, %v326
        %v329 = vmul.f32 %v325, %v327
        %v330 = vmul.f32 %v328, 0.5
        %v331 = vmul.f32 %v329, 0.5
        %v332 = vsub.f32 1.0, %v330
        %v333 = vsub.f32 1.0, %v331
        %v334 = vmul.f32 %v326, %v332
        %v335 = vmul.f32 %v327, %v333
        %v336 = vmul.f32 %v318, %v298
        %v337 = vmul.f32 %v319, %v299
        %v338 = vmul.f32 %v294, %v296
        %v339 = vmul.f32 %v295, %v297
        %v340 = vsub.f32 %v336, %v338
        %v341 = vsub.f32 %v337, %v339
        %v342 = vmul.f32 %v340, %v334
        %v343 = vmul.f32 %v341, %v335
        %v346 = vcombine.low %v342, %v343
        %348 = vst [vmem:[%s190] sm:$0xff] %v346
        %v349 = vmul.f32 %v318, %v296
        %v350 = vmul.f32 %v319, %v297
        %v351 = vmul.f32 %v290, %v298
        %v352 = vmul.f32 %v291, %v299
        %v353 = vsub.f32 %v349, %v351
        %v354 = vsub.f32 %v350, %v352
        %v355 = vmul.f32 %v353, %v334
        %v356 = vmul.f32 %v354, %v335
        %v359 = vcombine.low %v355, %v356
        %s361 = scalar_lea.vmem %s190, 8 [#allocation7]
        %362 = vst [vmem:[%s361] sm:$0xff] %v359
        %s363 = sand.u32 %s91, 1
        %s364 = scalar_lea.sflag [#allocation4], %s363
        %s365 = sand.u32 %s91, 1
        %s366 = smul.addr %s365, 16
        %s367 = scalar_lea.vmem [#allocation7], %s366
        // Predicated region
        $region37: #{tpu_custom_call.1} parent=27 // pred_check
          %p368 = pneg %p101
        $region38: #{tpu_custom_call.1} parent=27 // pred_check_branch
          %370 = sbr.rel (%p368) target = $region40
        $region39: #{tpu_custom_call.1} parent=27 // pred_region
          %s372 = ssub.s32 256, 256
          %373 = vsyncadd %s364, %s372
          %s374 = smul.addr %s25, 2
          %s375 = smul.addr %s24, 4
          %s376 = sadd.s32 %s374, %s375
          %s377 = smul.addr %s376, 64
          %s378 = scalar_lea.hbm %s2, %s377
          %s379 = sshll.u32 %s367, 4
          %s380 = int_to_ptr.vmem [resolvable:$true] %s379
          %385 = dma.vmem_to_hbm [thread:$0]  %s380, 256, %s378, %s364, 128, 128, 8
        $region40: #{tpu_custom_call.1} parent=27 // pred_fallthru
          _
      $region28: #{tpu_custom_call.1} parent=5 // pred_fallthru
        _
      %p386 = scmp.le.s32.totalorder 2, %s15
      // Predicated region
      $region41: #{tpu_custom_call.1} parent=5 // pred_check
        %p387 = pneg %p386
      $region42: #{tpu_custom_call.1} parent=5 // pred_check_branch
        %389 = sbr.rel (%p387) target = $region44
      $region43: #{tpu_custom_call.1} parent=5 // pred_region
        %s390 = ssub.s32 %s15, 2
        // Predicated region
        $region45: #{tpu_custom_call.1} parent=43 // pred_check
          %p391 = pneg %p107
        $region46: #{tpu_custom_call.1} parent=43 // pred_check_branch
          %393 = sbr.rel (%p391) target = $region48
        $region47: #{tpu_custom_call.1} parent=43 // pred_region
          %s394 = sand.u32 %s92, 1
          %s395 = scalar_lea.sflag [#allocation4], %s394
          %s396 = sand.u32 %s92, 1
          %s397 = smul.addr %s396, 16
          %s398 = scalar_lea.vmem [#allocation7], %s397
          %399 = dma.done %s395, 256
        $region48: #{tpu_custom_call.1} parent=43 // pred_fallthru
          _
      $region44: #{tpu_custom_call.1} parent=5 // pred_fallthru
        _
    $region6: #{tpu_custom_call.1} parent=1 // loop_footer
      %s19 = sadd.s32 1, %s15
    $region7: #{tpu_custom_call.1} parent=1 // loop_footer_branch
      %14 = sbr.rel target = $region3
    $region8: #{tpu_custom_call.1} parent=1 // loop_exit
      _
    %400 = vsyncpa [#allocation3], 1
    %s401 = scalar_lea.sflag [#allocation3], 1
    %402 = vsyncpa %s401, 1
    %403 = vsyncpa [#allocation6], 1
    %404 = vsyncpa [#allocation4], 1
    %s405 = scalar_lea.sflag [#allocation4], 1
    %406 = vsyncpa %s405, 1

</llo_original>
